<compile_context>
chip_gen: v7x
topology: tpu7x:2x2x1
jax: 0.10.0
libtpu: 0.0.40
codegen_flags: <defaults>
</compile_context>

<pallas_src>
import math

import jax
import jax.numpy as jnp
from jax.experimental import pallas as pl
from jax.experimental.pallas import tpu as pltpu

BN_EPS = 1e-5


# ------------------------------- helpers ------------------------------------

def _round_up(n, m):
    return ((n + m - 1) // m) * m


def _pad_rows(a, tp):
    p = a.shape[0]
    pp = _round_up(p, tp)
    if pp != p:
        a = jnp.pad(a, ((0, pp - p), (0, 0)))
    return a


def _im2col_3x3(x_pad, ho, wo, stride, dtype):
    """x_pad: (N, H+2, W+2, C) -> (N*ho*wo, 9*C) taps, (kh,kw)-major columns."""
    c = x_pad.shape[-1]
    cols = []
    for kh in range(3):
        for kw in range(3):
            cols.append(x_pad[:, kh:kh + (ho - 1) * stride + 1:stride,
                                 kw:kw + (wo - 1) * stride + 1:stride, :])
    taps = jnp.concatenate(cols, axis=-1)            # (N, ho, wo, 9*C)
    return taps.reshape(-1, 9 * c).astype(dtype)


# ----------------------------- Pallas kernels --------------------------------

def _conv_stats_kernel(taps_ref, w_ref, y_ref, stats_ref):
    """3x3 conv tile as a single K=9*Cin matmul + per-channel sum / sumsq.

    taps_ref : (TP, 9*Cin) bf16      w_ref     : (9*Cin, Cout) bf16 (resident)
    y_ref    : (TP, Cout)  f32       stats_ref : (2, Cout) f32 accumulator
                                      (row 0 = sum, row 1 = sum of squares)
    Zero-padded tap rows contribute exactly 0 (no bias), so stats stay exact.
    """
    y = jnp.dot(taps_ref[...], w_ref[...], preferred_element_type=jnp.float32)
    y_ref[...] = y

    @pl.when(pl.program_id(0) == 0)
    def _():
        stats_ref[...] = jnp.zeros_like(stats_ref)

    stats_ref[0:1, :] = stats_ref[0:1, :] + jnp.sum(y, axis=0, keepdims=True)
    stats_ref[1:2, :] = stats_ref[1:2, :] + jnp.sum(y * y, axis=0, keepdims=True)


def _bn_relu_kernel(y_ref, mean_ref, inv_ref, o_ref):
    """BN (batch stats, gamma=1, beta=0) + ReLU, f32 math."""
    h = (y_ref[...] - mean_ref[...]) * inv_ref[...]
    o_ref[...] = jnp.maximum(h, 0.0).astype(o_ref.dtype)


def _bn_addres_relu_kernel(y_ref, mean_ref, inv_ref, res_ref, o_ref):
    """BN + identity residual + ReLU (Cin == Cout)."""
    h = (y_ref[...] - mean_ref[...]) * inv_ref[...]
    h = h + res_ref[...].astype(jnp.float32)
    o_ref[...] = jnp.maximum(h, 0.0).astype(o_ref.dtype)


def _bn_projres_relu_kernel(y_ref, mean_ref, inv_ref, res_ref, wp_ref, bp_ref,
                            o_ref):
    """BN + 1x1-projected residual + ReLU (Cin != Cout)."""
    h = (y_ref[...] - mean_ref[...]) * inv_ref[...]
    r = jnp.dot(res_ref[...], wp_ref[...], preferred_element_type=jnp.float32)
    h = h + r + bp_ref[...]
    o_ref[...] = jnp.maximum(h, 0.0).astype(o_ref.dtype)


# ------------------------------ pallas_call glue ------------------------------

def _conv_stats(taps, w, p_real, tp):
    """Tiled conv matmul + BN batch-stat accumulation (arbitrary grid axis)."""
    pp, k = taps.shape
    cout = w.shape[1]
    y, stats = pl.pallas_call(
        _conv_stats_kernel,
        out_shape=(jax.ShapeDtypeStruct((pp, cout), jnp.float32),
                   jax.ShapeDtypeStruct((2, cout), jnp.float32)),
        grid=(pp // tp,),
        in_specs=[
            pl.BlockSpec((tp, k), lambda i: (i, 0)),
            pl.BlockSpec((k, cout), lambda i: (0, 0)),     # resident weights
        ],
        out_specs=(pl.BlockSpec((tp, cout), lambda i: (i, 0)),
                   pl.BlockSpec((2, cout), lambda i: (0, 0))),  # accumulator
        compiler_params=pltpu.CompilerParams(
            dimension_semantics=("arbitrary",)),
    )(taps, w)
    mean = stats[0:1] / p_real                               # (1, Cout)
    var = stats[1:2] / p_real - mean * mean                  # biased variance
    inv_std = jax.lax.rsqrt(var + BN_EPS)
    return y, mean, inv_std


def _finalize(y, mean, inv_std, tp, out_dtype, res=None, wp=None, bp=None):
    """Tiled BN normalize + optional (projected) residual + ReLU ("parallel")."""
    pp, cout = y.shape
    vec_spec = pl.BlockSpec((1, cout), lambda i: (0, 0))
    row_out = pl.BlockSpec((tp, cout), lambda i: (i, 0))
    if res is None:
        kernel = _bn_relu_kernel
        in_specs = [row_out, vec_spec, vec_spec]
        args = (y, mean, inv_std)
    elif wp is None:
        kernel = _bn_addres_relu_kernel
        in_specs = [row_out, vec_spec, vec_spec,
                    pl.BlockSpec((tp, res.shape[1]), lambda i: (i, 0))]
        args = (y, mean, inv_std, res)
    else:
        kernel = _bn_projres_relu_kernel
        in_specs = [row_out, vec_spec, vec_spec,
                    pl.BlockSpec((tp, res.shape[1]), lambda i: (i, 0)),
                    pl.BlockSpec(wp.shape, lambda i: (0, 0)),
                    pl.BlockSpec((1, cout), lambda i: (0, 0))]
        args = (y, mean, inv_std, res, wp, bp.reshape(1, cout).astype(jnp.float32))
    return pl.pallas_call(
        kernel,
        out_shape=jax.ShapeDtypeStruct((pp, cout), out_dtype),
        grid=(pp // tp,),
        in_specs=in_specs,
        out_specs=pl.BlockSpec((tp, cout), lambda i: (i, 0)),
        compiler_params=pltpu.CompilerParams(
            dimension_semantics=("parallel",)),
    )(*args)


# ------------------------------ forward pass ----------------------------------

def resnet_layer_1_forward(x_nchw, params, *, sub_sampling=False, nores=False,
                           tile_p=512):
    """Pallas implementation of ResNetLayer_1.forward.  x_nchw: (N, Cin, H, W)."""
    w1, b1, w2, b2, wp, bp = params   # conv weights in HWIO, proj as (Cin, Cout)
    del b1, b2  # conv biases are exactly cancelled by the following batch-norms
    x = jnp.transpose(x_nchw, (0, 2, 3, 1)).astype(jnp.float32)   # NHWC
    n, h_dim, w_dim, cin = x.shape
    cout = w2.shape[-1]
    stride = 2 if sub_sampling else 1
    use_proj = (cin != cout)

    # ---- stage 1: conv1(3x3, stride 1, pad 1) -> BN(batch stats) -> ReLU ----
    p1 = n * h_dim * w_dim
    tp1 = min(tile_p, _round_up(p1, 16))
    x_pad = jnp.pad(x, ((0, 0), (1, 1), (1, 1), (0, 0)))
    taps1 = _pad_rows(_im2col_3x3(x_pad, h_dim, w_dim, 1, jnp.bfloat16), tp1)
    y1, mean1, inv1 = _conv_stats(
        taps1, w1.reshape(9 * cin, cin).astype(jnp.bfloat16), p1, tp1)
    h = _finalize(y1, mean1, inv1, tp1, jnp.bfloat16)[:p1]
    h = h.reshape(n, h_dim, w_dim, cin)

    # ---- stage 2: conv2(3x3, stride, pad 1) -> BN -> (+residual) -> ReLU ----
    ho = (h_dim - 1) // stride + 1
    wo = (w_dim - 1) // stride + 1
    p2 = n * ho * wo
    tp2 = min(tile_p, _round_up(p2, 16))
    h_pad = jnp.pad(h, ((0, 0), (1, 1), (1, 1), (0, 0)))
    taps2 = _pad_rows(_im2col_3x3(h_pad, ho, wo, stride, jnp.bfloat16), tp2)
    y2, mean2, inv2 = _conv_stats(
        taps2, w2.reshape(9 * cin, cout).astype(jnp.bfloat16), p2, tp2)

    if nores:
        out_flat = _finalize(y2, mean2, inv2, tp2, jnp.float32)
    else:
        res = x[:, ::stride, ::stride, :].reshape(p2, cin)
        if use_proj:
            out_flat = _finalize(y2, mean2, inv2, tp2, jnp.float32,
                                 res=_pad_rows(res.astype(jnp.bfloat16), tp2),
                                 wp=wp.astype(jnp.bfloat16), bp=bp)
        else:
            out_flat = _finalize(y2, mean2, inv2, tp2, jnp.float32,
                                 res=_pad_rows(res, tp2))

    # TODO(synk): dropout with drop_p > 0 (training) would need in-kernel PRNG
    # (pltpu.prng_seed / prng_random_bits); drop_p = 0.0 here -> identity.
    out = out_flat[:p2].reshape(n, ho, wo, cout)
    return jnp.transpose(out, (0, 3, 1, 2))             # back to NCHW


# ------------------------------ pure-JAX reference ----------------------------

def reference_forward(x_nchw, params, *, sub_sampling=False, nores=False):
    w1, b1, w2, b2, wp, bp = params
    x = jnp.transpose(x_nchw, (0, 2, 3, 1)).astype(jnp.float32)
    cin, cout = w1.shape[2], w2.shape[3]
    stride = 2 if sub_sampling else 1
    dn = ("NHWC", "HWIO", "NHWC")

    def bn(y):
        m = jnp.mean(y, axis=(0, 1, 2), keepdims=True)
        v = jnp.var(y, axis=(0, 1, 2), keepdims=True)
        return (y - m) / jnp.sqrt(v + BN_EPS)

    h = jax.lax.conv_general_dilated(x, w1, (1, 1), [(1, 1), (1, 1)],
                                     dimension_numbers=dn) + b1
    h = jax.nn.relu(bn(h))
    y = jax.lax.conv_general_dilated(h, w2, (stride, stride), [(1, 1), (1, 1)],
                                     dimension_numbers=dn) + b2
    y = bn(y)
    old = x
    if cin != cout:
        old = jax.lax.conv_general_dilated(
            x, wp.reshape(1, 1, cin, cout), (stride, stride), "VALID",
            dimension_numbers=dn) + bp
    if not nores:
        y = y + old
    return jnp.transpose(jax.nn.relu(y), (0, 3, 1, 2))


# ---------------------------------- main ---------------------------------------

if __name__ == "__main__":
    key = jax.random.PRNGKey(0)
    N, H, W = 2, 16, 16

    def xavier(k, shape, fan_in, fan_out):
        std = math.sqrt(2.0 / (fan_in + fan_out))
        return std * jax.random.normal(k, shape, jnp.float32)

    def make_params(k, cin, cout):
        ks = jax.random.split(k, 6)
        w1 = xavier(ks[0], (3, 3, cin, cin), cin * 9, cin * 9)       # conv1 HWIO
        b1 = 0.1 * jax.random.normal(ks[1], (cin,), jnp.float32)
        w2 = xavier(ks[2], (3, 3, cin, cout), cin * 9, cout * 9)     # conv2 HWIO
        b2 = 0.1 * jax.random.normal(ks[3], (cout,), jnp.float32)
        if cin != cout:
            wp = xavier(ks[4], (cin, cout), cin, cout)               # 1x1 proj
            bp = 0.1 * jax.random.normal(ks[5], (cout,), jnp.float32)
        else:
            wp = bp = None
        return (w1, b1, w2, b2, wp, bp)

    kx, kp1, kp2 = jax.random.split(key, 3)

    def check(out, ref):
        max_err = float(jnp.max(jnp.abs(out - ref)))
        mean_err = float(jnp.mean(jnp.abs(out - ref)))
        assert mean_err < 2e-2, ("mean_err", mean_err)
        assert jnp.allclose(out, ref, atol=1e-1, rtol=1e-1), ("max_err", max_err)

    # Config A: Cin != Cout -> projected residual path (with/without stride, nores)
    Cin, Cout = 4, 8
    x = jax.random.normal(kx, (N, Cin, H, W), jnp.float32)
    params = make_params(kp1, Cin, Cout)
    for sub_sampling, nores in ((False, False), (True, False), (False, True)):
        out = jax.block_until_ready(
            resnet_layer_1_forward(x, params, sub_sampling=sub_sampling, nores=nores))
        ref = reference_forward(x, params, sub_sampling=sub_sampling, nores=nores)
        Ho = H // 2 if sub_sampling else H
        assert out.shape == (N, Cout, Ho, Ho), out.shape
        check(out, ref)

    # Config B: Cin == Cout -> identity residual path (no projection)
    params2 = make_params(kp2, Cin, Cin)
    out = jax.block_until_ready(
        resnet_layer_1_forward(x, params2, sub_sampling=False, nores=False))
    ref = reference_forward(x, params2, sub_sampling=False, nores=False)
    assert out.shape == (N, Cin, H, W), out.shape
    check(out, ref)

    print("KERNEL_OK")
</pallas_src>

<mosaic_0001>
module attributes {stable_mosaic.version = 11 : i64} {
  func.func @_conv_stats_kernel(%arg0: i32, %arg1: memref<512x36xbf16, #tpu.memory_space<vmem>>, %arg2: memref<36x4xbf16, #tpu.memory_space<vmem>>, %arg3: memref<512x4xf32, #tpu.memory_space<vmem>>, %arg4: memref<2x4xf32, #tpu.memory_space<vmem>>) attributes {dimension_semantics = [#tpu.dimension_semantics<arbitrary>], iteration_bounds = array<i64: 1>, scalar_prefetch = 0 : i64, scratch_operands = 0 : i64, tpu.core_type = #tpu.core_type<tc>, window_params = [{transform_indices = @transform_0, window_bounds = array<i64: 512, 36>}, {pipeline_mode = #tpu.pipeline_mode<synchronous>, transform_indices = @transform_1, window_bounds = array<i64: 36, 4>}, {transform_indices = @transform_2, window_bounds = array<i64: 512, 4>}, {pipeline_mode = #tpu.pipeline_mode<synchronous>, transform_indices = @transform_3, window_bounds = array<i64: 2, 4>}]} {
    %c0 = arith.constant 0 : index
    %c0_0 = arith.constant 0 : index
    %0 = vector.load %arg1[%c0, %c0_0] : memref<512x36xbf16, #tpu.memory_space<vmem>>, vector<512x36xbf16>
    %c0_1 = arith.constant 0 : index
    %c0_2 = arith.constant 0 : index
    %1 = vector.load %arg2[%c0_1, %c0_2] : memref<36x4xbf16, #tpu.memory_space<vmem>>, vector<36x4xbf16>
    %cst = arith.constant dense<0.000000e+00> : vector<512x4xf32>
    %2 = tpu.matmul %0, %1, %cst {dimension_numbers = #tpu.dot_dimension_numbers<[1], [0], [0], [1], [0, 0, 1, 1], [], []>} : vector<512x36xbf16>, vector<36x4xbf16>, vector<512x4xf32> -> vector<512x4xf32>
    %c0_3 = arith.constant 0 : index
    %c0_4 = arith.constant 0 : index
    %3 = vector.load %arg3[%c0_3, %c0_4] : memref<512x4xf32, #tpu.memory_space<vmem>>, vector<512x4xf32>
    tpu.vector_store %arg3[%c0_3, %c0_4], %2 {strides = array<i32>} : memref<512x4xf32, #tpu.memory_space<vmem>>, vector<512x4xf32>,
    %c0_i32 = arith.constant 0 : i32
    %4 = arith.cmpi eq, %arg0, %c0_i32 : i32
    %5 = arith.extui %4 : i1 to i32
    %c0_i32_5 = arith.constant 0 : i32
    %6 = arith.cmpi ne, %5, %c0_i32_5 : i32
    scf.if %6 {
      %cst_15 = arith.constant 0.000000e+00 : f32
      %18 = vector.broadcast %cst_15 : f32 to vector<2x4xf32>
      %c0_16 = arith.constant 0 : index
      %c0_17 = arith.constant 0 : index
      %19 = vector.load %arg4[%c0_16, %c0_17] : memref<2x4xf32, #tpu.memory_space<vmem>>, vector<2x4xf32>
      tpu.vector_store %arg4[%c0_16, %c0_17], %18 {strides = array<i32>} : memref<2x4xf32, #tpu.memory_space<vmem>>, vector<2x4xf32>,
    } else {
    }
    %c0_6 = arith.constant 0 : index
    %c0_7 = arith.constant 0 : index
    %7 = vector.load %arg4[%c0_6, %c0_7] : memref<2x4xf32, #tpu.memory_space<vmem>>, vector<1x4xf32>
    %cst_8 = arith.constant dense<0.000000e+00> : vector<4xf32>
    %8 = vector.multi_reduction <add>, %2, %cst_8 [0] : vector<512x4xf32> to vector<4xf32>
    %9 = vector.shape_cast %8 : vector<4xf32> to vector<1x4xf32>
    %10 = arith.addf %7, %9 : vector<1x4xf32>
    %c0_9 = arith.constant 0 : index
    %c0_10 = arith.constant 0 : index
    %11 = vector.load %arg4[%c0_9, %c0_10] : memref<2x4xf32, #tpu.memory_space<vmem>>, vector<1x4xf32>
    tpu.vector_store %arg4[%c0_9, %c0_10], %10 {strides = array<i32>} : memref<2x4xf32, #tpu.memory_space<vmem>>, vector<1x4xf32>,
    %c1 = arith.constant 1 : index
    %c0_11 = arith.constant 0 : index
    %12 = vector.load %arg4[%c1, %c0_11] : memref<2x4xf32, #tpu.memory_space<vmem>>, vector<1x4xf32>
    %13 = arith.mulf %2, %2 : vector<512x4xf32>
    %cst_12 = arith.constant dense<0.000000e+00> : vector<4xf32>
    %14 = vector.multi_reduction <add>, %13, %cst_12 [0] : vector<512x4xf32> to vector<4xf32>
    %15 = vector.shape_cast %14 : vector<4xf32> to vector<1x4xf32>
    %16 = arith.addf %12, %15 : vector<1x4xf32>
    %c1_13 = arith.constant 1 : index
    %c0_14 = arith.constant 0 : index
    %17 = vector.load %arg4[%c1_13, %c0_14] : memref<2x4xf32, #tpu.memory_space<vmem>>, vector<1x4xf32>
    tpu.vector_store %arg4[%c1_13, %c0_14], %16 {strides = array<i32>} : memref<2x4xf32, #tpu.memory_space<vmem>>, vector<1x4xf32>,
    return
  }
  func.func @transform_0(%arg0: i32) -> (i32, i32) {
    %c0_i32 = arith.constant 0 : i32
    %c0_i32_0 = arith.constant 0 : i32
    return %arg0, %c0_i32 : i32, i32
  }
  func.func @transform_1(%arg0: i32) -> (i32, i32) {
    %c0_i32 = arith.constant 0 : i32
    %c0_i32_0 = arith.constant 0 : i32
    %c0_i32_1 = arith.constant 0 : i32
    return %c0_i32, %c0_i32_0 : i32, i32
  }
  func.func @transform_2(%arg0: i32) -> (i32, i32) {
    %c0_i32 = arith.constant 0 : i32
    %c0_i32_0 = arith.constant 0 : i32
    return %arg0, %c0_i32 : i32, i32
  }
  func.func @transform_3(%arg0: i32) -> (i32, i32) {
    %c0_i32 = arith.constant 0 : i32
    %c0_i32_0 = arith.constant 0 : i32
    %c0_i32_1 = arith.constant 0 : i32
    return %c0_i32, %c0_i32_0 : i32, i32
  }
}

</mosaic_0001>

<llo_original>
// kernel: tpu_custom_call.1
$region0: #{tpu_custom_call.1}
  #allocation0 [shape = 'u32[]', space=smem, size = 0x4, offset = 0x4, fixed_abs, tag = 'smem constant byte address 0x4 - core index']
  #allocation1 [shape = 'u32[144,128]{1,0:T(1,128)}', space=vmem, size = 0x12000, scoped, tag = 'internal scratch']
  %s0 = inlined_call_operand.vmem [shape: bf16[512,36], index: 0, kind: input, shape index: {}]
  %s1 = inlined_call_operand.vmem [shape: bf16[36,4], index: 1, kind: input, shape index: {}]
  %s2 = inlined_call_operand.vmem [shape: f32[512,4], index: 2, kind: output, shape index: {0}]
  %s3 = inlined_call_operand.hbm [shape: f32[2,4], index: 3, kind: output, shape index: {1}]
  %4 = xla_tuple %s2, %s3
  %s5 = sld [smem:[#allocation0]]
  $region30: #{tpu_custom_call.1} parent=0
    _
  %s7 = ssub.s32 1, %s5
  %s8 = scalar_select 0, %s7, %s5
  $region1: #{tpu_custom_call.1} parent=0
    #allocation2 [shape = 'u8[1024]{0}', space=vmem, size = 0x400, scoped, tag = 'output window, operand 1, single buffered']
    #allocation3 [shape = 's32[1]{0}', space=sflag, size = 0x4, scoped, tag = 'scoped memory for tpu_custom_call.1']
    %9 = vsyncpa [#allocation3], 0
    // Predicated region
    $region2: #{tpu_custom_call.1} parent=1 // pred_check
      _
    $region3: #{tpu_custom_call.1} parent=1 // pred_check_branch
      %11 = sbr.rel (0) target = $region5
    $region4: #{tpu_custom_call.1} parent=1 // pred_region
      _
    $region5: #{tpu_custom_call.1} parent=1 // pred_fallthru
      _
    // Predicated region
    $region6: #{tpu_custom_call.1} parent=1 // pred_check
      _
    $region7: #{tpu_custom_call.1} parent=1 // pred_check_branch
      %13 = sbr.rel (0) target = $region9
    $region8: #{tpu_custom_call.1} parent=1 // pred_region
      _
    $region9: #{tpu_custom_call.1} parent=1 // pred_fallthru
      _
    %v15 = vld [vmem:[%s0] sm:$0xf]
    %v16 = vld [vmem:[%s0 + $0x4] sm:$0xf]
    %v17 = vld [vmem:[%s0 + $0x8] sm:$0xf]
    %v18 = vld [vmem:[%s0 + $0xc] sm:$0xf]
    %v19 = vld [vmem:[%s0 + $0x10] sm:$0xf]
    %v20 = vld [vmem:[%s0 + $0x14] sm:$0xf]
    %v21 = vld [vmem:[%s0 + $0x18] sm:$0xf]
    %v22 = vld [vmem:[%s0 + $0x1c] sm:$0xf]
    %v23 = vld [vmem:[%s0 + $0x20] sm:$0xf]
    %v24 = vld [vmem:[%s0 + $0x24] sm:$0xf]
    %v25 = vld [vmem:[%s0 + $0x28] sm:$0xf]
    %v26 = vld [vmem:[%s0 + $0x2c] sm:$0xf]
    %v27 = vld [vmem:[%s0 + $0x30] sm:$0xf]
    %v28 = vld [vmem:[%s0 + $0x34] sm:$0xf]
    %v29 = vld [vmem:[%s0 + $0x38] sm:$0xf]
    %v30 = vld [vmem:[%s0 + $0x3c] sm:$0xf]
    %v31 = vld [vmem:[%s0 + $0x40] sm:$0xf]
    %v32 = vld [vmem:[%s0 + $0x44] sm:$0xf]
    %v33 = vld [vmem:[%s0 + $0x48] sm:$0xf]
    %v34 = vld [vmem:[%s0 + $0x4c] sm:$0xf]
    %v35 = vld [vmem:[%s0 + $0x50] sm:$0xf]
    %v36 = vld [vmem:[%s0 + $0x54] sm:$0xf]
    %v37 = vld [vmem:[%s0 + $0x58] sm:$0xf]
    %v38 = vld [vmem:[%s0 + $0x5c] sm:$0xf]
    %v39 = vld [vmem:[%s0 + $0x60] sm:$0xf]
    %v40 = vld [vmem:[%s0 + $0x64] sm:$0xf]
    %v41 = vld [vmem:[%s0 + $0x68] sm:$0xf]
    %v42 = vld [vmem:[%s0 + $0x6c] sm:$0xf]
    %v43 = vld [vmem:[%s0 + $0x70] sm:$0xf]
    %v44 = vld [vmem:[%s0 + $0x74] sm:$0xf]
    %v45 = vld [vmem:[%s0 + $0x78] sm:$0xf]
    %v46 = vld [vmem:[%s0 + $0x7c] sm:$0xf]
    %v47 = vld [vmem:[%s0 + $0x80] sm:$0xf]
    %v48 = vld [vmem:[%s0 + $0x84] sm:$0xf]
    %v49 = vld [vmem:[%s0 + $0x88] sm:$0xf]
    %v50 = vld [vmem:[%s0 + $0x8c] sm:$0xf]
    %v51 = vld [vmem:[%s0 + $0x90] sm:$0xf]
    %v52 = vld [vmem:[%s0 + $0x94] sm:$0xf]
    %v53 = vld [vmem:[%s0 + $0x98] sm:$0xf]
    %v54 = vld [vmem:[%s0 + $0x9c] sm:$0xf]
    %v55 = vld [vmem:[%s0 + $0xa0] sm:$0xf]
    %v56 = vld [vmem:[%s0 + $0xa4] sm:$0xf]
    %v57 = vld [vmem:[%s0 + $0xa8] sm:$0xf]
    %v58 = vld [vmem:[%s0 + $0xac] sm:$0xf]
    %v59 = vld [vmem:[%s0 + $0xb0] sm:$0xf]
    %v60 = vld [vmem:[%s0 + $0xb4] sm:$0xf]
    %v61 = vld [vmem:[%s0 + $0xb8] sm:$0xf]
    %v62 = vld [vmem:[%s0 + $0xbc] sm:$0xf]
    %v63 = vld [vmem:[%s0 + $0xc0] sm:$0xf]
    %v64 = vld [vmem:[%s0 + $0xc4] sm:$0xf]
    %v65 = vld [vmem:[%s0 + $0xc8] sm:$0xf]
    %v66 = vld [vmem:[%s0 + $0xcc] sm:$0xf]
    %v67 = vld [vmem:[%s0 + $0xd0] sm:$0xf]
    %v68 = vld [vmem:[%s0 + $0xd4] sm:$0xf]
    %v69 = vld [vmem:[%s0 + $0xd8] sm:$0xf]
    %v70 = vld [vmem:[%s0 + $0xdc] sm:$0xf]
    %v71 = vld [vmem:[%s0 + $0xe0] sm:$0xf]
    %v72 = vld [vmem:[%s0 + $0xe4] sm:$0xf]
    %v73 = vld [vmem:[%s0 + $0xe8] sm:$0xf]
    %v74 = vld [vmem:[%s0 + $0xec] sm:$0xf]
    %v75 = vld [vmem:[%s0 + $0xf0] sm:$0xf]
    %v76 = vld [vmem:[%s0 + $0xf4] sm:$0xf]
    %v77 = vld [vmem:[%s0 + $0xf8] sm:$0xf]
    %v78 = vld [vmem:[%s0 + $0xfc] sm:$0xf]
    %v79 = vld [vmem:[%s1] sm:$0xf]
    %v80 = vld [vmem:[%s1 + $0x4] sm:$0xf]
    %v81 = vld [vmem:[%s1 + $0x8] sm:$0xf]
    %v82 = vld [vmem:[%s1 + $0xc] sm:$0xf]
    %v83 = vld [vmem:[%s1 + $0x10] sm:$0x3]
    %v148 = vunpack.c.l.b16 %v15
    %v149 = vunpack.c.l.b16 %v16
    %v150 = vunpack.c.l.b16 %v17
    %v151 = vunpack.c.l.b16 %v18
    %v152 = vunpack.c.l.b16 %v19
    %v153 = vunpack.c.l.b16 %v20
    %v154 = vunpack.c.l.b16 %v21
    %v155 = vunpack.c.l.b16 %v22
    %v156 = vunpack.c.l.b16 %v23
    %v157 = vunpack.c.l.b16 %v24
    %v158 = vunpack.c.l.b16 %v25
    %v159 = vunpack.c.l.b16 %v26
    %v160 = vunpack.c.l.b16 %v27
    %v161 = vunpack.c.l.b16 %v28
    %v162 = vunpack.c.l.b16 %v29
    %v163 = vunpack.c.l.b16 %v30
    %v164 = vunpack.c.l.b16 %v31
    %v165 = vunpack.c.l.b16 %v32
    %v166 = vunpack.c.l.b16 %v33
    %v167 = vunpack.c.l.b16 %v34
    %v168 = vunpack.c.l.b16 %v35
    %v169 = vunpack.c.l.b16 %v36
    %v170 = vunpack.c.l.b16 %v37
    %v171 = vunpack.c.l.b16 %v38
    %v172 = vunpack.c.l.b16 %v39
    %v173 = vunpack.c.l.b16 %v40
    %v174 = vunpack.c.l.b16 %v41
    %v175 = vunpack.c.l.b16 %v42
    %v176 = vunpack.c.l.b16 %v43
    %v177 = vunpack.c.l.b16 %v44
    %v178 = vunpack.c.l.b16 %v45
    %v179 = vunpack.c.l.b16 %v46
    %v180 = vunpack.c.l.b16 %v47
    %v181 = vunpack.c.l.b16 %v48
    %v182 = vunpack.c.l.b16 %v49
    %v183 = vunpack.c.l.b16 %v50
    %v184 = vunpack.c.l.b16 %v51
    %v185 = vunpack.c.l.b16 %v52
    %v186 = vunpack.c.l.b16 %v53
    %v187 = vunpack.c.l.b16 %v54
    %v188 = vunpack.c.l.b16 %v55
    %v189 = vunpack.c.l.b16 %v56
    %v190 = vunpack.c.l.b16 %v57
    %v191 = vunpack.c.l.b16 %v58
    %v192 = vunpack.c.l.b16 %v59
    %v193 = vunpack.c.l.b16 %v60
    %v194 = vunpack.c.l.b16 %v61
    %v195 = vunpack.c.l.b16 %v62
    %v196 = vunpack.c.l.b16 %v63
    %v197 = vunpack.c.l.b16 %v64
    %v198 = vunpack.c.l.b16 %v65
    %v199 = vunpack.c.l.b16 %v66
    %v200 = vunpack.c.l.b16 %v67
    %v201 = vunpack.c.l.b16 %v68
    %v202 = vunpack.c.l.b16 %v69
    %v203 = vunpack.c.l.b16 %v70
    %v204 = vunpack.c.l.b16 %v71
    %v205 = vunpack.c.l.b16 %v72
    %v206 = vunpack.c.l.b16 %v73
    %v207 = vunpack.c.l.b16 %v74
    %v208 = vunpack.c.l.b16 %v75
    %v209 = vunpack.c.l.b16 %v76
    %v210 = vunpack.c.l.b16 %v77
    %v211 = vunpack.c.l.b16 %v78
    %v212 = vpack.c.b16 %v149, %v148
    %v213 = vpack.c.b16 %v151, %v150
    %v214 = vpack.c.b16 %v153, %v152
    %v215 = vpack.c.b16 %v155, %v154
    %v216 = vpack.c.b16 %v157, %v156
    %v217 = vpack.c.b16 %v159, %v158
    %v218 = vpack.c.b16 %v161, %v160
    %v219 = vpack.c.b16 %v163, %v162
    %v220 = vpack.c.b16 %v165, %v164
    %v221 = vpack.c.b16 %v167, %v166
    %v222 = vpack.c.b16 %v169, %v168
    %v223 = vpack.c.b16 %v171, %v170
    %v224 = vpack.c.b16 %v173, %v172
    %v225 = vpack.c.b16 %v175, %v174
    %v226 = vpack.c.b16 %v177, %v176
    %v227 = vpack.c.b16 %v179, %v178
    %v228 = vpack.c.b16 %v181, %v180
    %v229 = vpack.c.b16 %v183, %v182
    %v230 = vpack.c.b16 %v185, %v184
    %v231 = vpack.c.b16 %v187, %v186
    %v232 = vpack.c.b16 %v189, %v188
    %v233 = vpack.c.b16 %v191, %v190
    %v234 = vpack.c.b16 %v193, %v192
    %v235 = vpack.c.b16 %v195, %v194
    %v236 = vpack.c.b16 %v197, %v196
    %v237 = vpack.c.b16 %v199, %v198
    %v238 = vpack.c.b16 %v201, %v200
    %v239 = vpack.c.b16 %v203, %v202
    %v240 = vpack.c.b16 %v205, %v204
    %v241 = vpack.c.b16 %v207, %v206
    %v242 = vpack.c.b16 %v209, %v208
    %v243 = vpack.c.b16 %v211, %v210
    %v249 = vunpack.c.l.b16 %v79
    %v250 = vunpack.c.l.b16 %v80
    %v251 = vunpack.c.l.b16 %v81
    %v252 = vunpack.c.l.b16 %v82
    %v253 = vunpack.c.l.b16 %v83
    %v254 = vpack.c.b16 %v250, %v249
    %v255 = vpack.c.b16 %v252, %v251
    %v256 = vpack.c.b16 %v253, %v253
    %vm259 = vcmask 293888
    %v261 = vsel %vm259, %v212, 0
    %v264 = vsel %vm259, %v213, 0
    %v267 = vsel %vm259, %v214, 0
    %v270 = vsel %vm259, %v215, 0
    %v273 = vsel %vm259, %v216, 0
    %v276 = vsel %vm259, %v217, 0
    %v279 = vsel %vm259, %v218, 0
    %v282 = vsel %vm259, %v219, 0
    %v285 = vsel %vm259, %v220, 0
    %v288 = vsel %vm259, %v221, 0
    %v291 = vsel %vm259, %v222, 0
    %v294 = vsel %vm259, %v223, 0
    %v297 = vsel %vm259, %v224, 0
    %v300 = vsel %vm259, %v225, 0
    %v303 = vsel %vm259, %v226, 0
    %v306 = vsel %vm259, %v227, 0
    %v309 = vsel %vm259, %v228, 0
    %v312 = vsel %vm259, %v229, 0
    %v315 = vsel %vm259, %v230, 0
    %v318 = vsel %vm259, %v231, 0
    %v321 = vsel %vm259, %v232, 0
    %v324 = vsel %vm259, %v233, 0
    %v327 = vsel %vm259, %v234, 0
    %v330 = vsel %vm259, %v235, 0
    %v333 = vsel %vm259, %v236, 0
    %v336 = vsel %vm259, %v237, 0
    %v339 = vsel %vm259, %v238, 0
    %v342 = vsel %vm259, %v239, 0
    %v345 = vsel %vm259, %v240, 0
    %v348 = vsel %vm259, %v241, 0
    %v351 = vsel %vm259, %v242, 0
    %v354 = vsel %vm259, %v243, 0
    %vm356 = vcmask 1041408
    %v358 = vsel %vm356, %v256, 0
    %360 = vmatprep.subr.bf16.mxu0 0
    %361 = vmatpush1.bf16.msra.mxu0 %v254
    %362 = vmatprep.subr.bf16.mxu0 0
    %363 = vmatpush1.bf16.msra.mxu0 %v255
    %364 = vmatprep.subr.bf16.mxu0 0
    %365 = vmatpush1.bf16.msra.mxu0 %v358
    %366 = vmatprep.subr.bf16.mxu0 0
    %367 = vmatpush1.bf16.msra.mxu0 0
    %368 = vmatprep.subr.bf16.mxu0 0
    %369 = vmatpush1.bf16.msra.mxu0 0
    %370 = vmatprep.subr.bf16.mxu0 0
    %371 = vmatpush1.bf16.msra.mxu0 0
    %372 = vmatprep.subr.bf16.mxu0 0
    %373 = vmatpush1.bf16.msra.mxu0 0
    %374 = vmatprep.subr.bf16.mxu0 0
    %375 = vmatpush1.bf16.msra.mxu0 0
    %376 = vmatprep.subr.bf16.mxu0 0
    %377 = vmatpush1.bf16.msra.mxu0 0
    %378 = vmatprep.subr.bf16.mxu0 0
    %379 = vmatpush1.bf16.msra.mxu0 0
    %380 = vmatprep.subr.bf16.mxu0 0
    %381 = vmatpush1.bf16.msra.mxu0 0
    %382 = vmatprep.subr.bf16.mxu0 0
    %383 = vmatpush1.bf16.msra.mxu0 0
    %384 = vmatprep.subr.bf16.mxu0 0
    %385 = vmatpush1.bf16.msra.mxu0 0
    %386 = vmatprep.subr.bf16.mxu0 0
    %387 = vmatpush1.bf16.msra.mxu0 0
    %388 = vmatprep.subr.bf16.mxu0 0
    %389 = vmatpush1.bf16.msra.mxu0 0
    %390 = vmatprep.subr.bf16.mxu0 0
    %391 = vmatpush1.bf16.msra.mxu0 0
    %392 = vmatprep.mubr.bf16.mxu0 0
    %393 = vmatmul.mubr.bf16.gmra.mrb[0].mxu0 %v261
    %v394 = vpop.f32.mrb[0].mxu0
    %v395 = vadd.f32 0.0, %v394
    %v396 = vpop.f32.mrb[0].mxu0
    %v397 = vpop.f32.mrb[0].mxu0
    %v398 = vadd.f32 0.0, %v397
    %v399 = vpop.f32.mrb[0].mxu0
    %400 = vmatprep.mubr.bf16.mxu0 0
    %401 = vmatmul.mubr.bf16.gmra.mrb[0].mxu0 %v264
    %v402 = vpop.f32.mrb[0].mxu0
    %v403 = vadd.f32 0.0, %v402
    %v404 = vpop.f32.mrb[0].mxu0
    %v405 = vpop.f32.mrb[0].mxu0
    %v406 = vadd.f32 0.0, %v405
    %v407 = vpop.f32.mrb[0].mxu0
    %408 = vmatprep.mubr.bf16.mxu0 0
    %409 = vmatmul.mubr.bf16.gmra.mrb[0].mxu0 %v267
    %v410 = vpop.f32.mrb[0].mxu0
    %v411 = vadd.f32 0.0, %v410
    %v412 = vpop.f32.mrb[0].mxu0
    %v413 = vpop.f32.mrb[0].mxu0
    %v414 = vadd.f32 0.0, %v413
    %v415 = vpop.f32.mrb[0].mxu0
    %416 = vmatprep.mubr.bf16.mxu0 0
    %417 = vmatmul.mubr.bf16.gmra.mrb[0].mxu0 %v270
    %v418 = vpop.f32.mrb[0].mxu0
    %v419 = vadd.f32 0.0, %v418
    %v420 = vpop.f32.mrb[0].mxu0
    %v421 = vpop.f32.mrb[0].mxu0
    %v422 = vadd.f32 0.0, %v421
    %v423 = vpop.f32.mrb[0].mxu0
    %424 = vmatprep.mubr.bf16.mxu0 0
    %425 = vmatmul.mubr.bf16.gmra.mrb[0].mxu0 %v273
    %v426 = vpop.f32.mrb[0].mxu0
    %v427 = vadd.f32 0.0, %v426
    %v428 = vpop.f32.mrb[0].mxu0
    %v429 = vpop.f32.mrb[0].mxu0
    %v430 = vadd.f32 0.0, %v429
    %v431 = vpop.f32.mrb[0].mxu0
    %432 = vmatprep.mubr.bf16.mxu0 0
    %433 = vmatmul.mubr.bf16.gmra.mrb[0].mxu0 %v276
    %v434 = vpop.f32.mrb[0].mxu0
    %v435 = vadd.f32 0.0, %v434
    %v436 = vpop.f32.mrb[0].mxu0
    %v437 = vpop.f32.mrb[0].mxu0
    %v438 = vadd.f32 0.0, %v437
    %v439 = vpop.f32.mrb[0].mxu0
    %440 = vmatprep.mubr.bf16.mxu0 0
    %441 = vmatmul.mubr.bf16.gmra.mrb[0].mxu0 %v279
    %v442 = vpop.f32.mrb[0].mxu0
    %v443 = vadd.f32 0.0, %v442
    %v444 = vpop.f32.mrb[0].mxu0
    %v445 = vpop.f32.mrb[0].mxu0
    %v446 = vadd.f32 0.0, %v445
    %v447 = vpop.f32.mrb[0].mxu0
    %448 = vmatprep.mubr.bf16.mxu0 0
    %449 = vmatmul.mubr.bf16.gmra.mrb[0].mxu0 %v282
    %v450 = vpop.f32.mrb[0].mxu0
    %v451 = vadd.f32 0.0, %v450
    %v452 = vpop.f32.mrb[0].mxu0
    %v453 = vpop.f32.mrb[0].mxu0
    %v454 = vadd.f32 0.0, %v453
    %v455 = vpop.f32.mrb[0].mxu0
    %456 = vmatprep.mubr.bf16.mxu0 0
    %457 = vmatmul.mubr.bf16.gmra.mrb[0].mxu0 %v285
    %v458 = vpop.f32.mrb[0].mxu0
    %v459 = vadd.f32 0.0, %v458
    %v460 = vpop.f32.mrb[0].mxu0
    %v461 = vpop.f32.mrb[0].mxu0
    %v462 = vadd.f32 0.0, %v461
    %v463 = vpop.f32.mrb[0].mxu0
    %464 = vmatprep.mubr.bf16.mxu0 0
    %465 = vmatmul.mubr.bf16.gmra.mrb[0].mxu0 %v288
    %v466 = vpop.f32.mrb[0].mxu0
    %v467 = vadd.f32 0.0, %v466
    %v468 = vpop.f32.mrb[0].mxu0
    %v469 = vpop.f32.mrb[0].mxu0
    %v470 = vadd.f32 0.0, %v469
    %v471 = vpop.f32.mrb[0].mxu0
    %472 = vmatprep.mubr.bf16.mxu0 0
    %473 = vmatmul.mubr.bf16.gmra.mrb[0].mxu0 %v291
    %v474 = vpop.f32.mrb[0].mxu0
    %v475 = vadd.f32 0.0, %v474
    %v476 = vpop.f32.mrb[0].mxu0
    %v477 = vpop.f32.mrb[0].mxu0
    %v478 = vadd.f32 0.0, %v477
    %v479 = vpop.f32.mrb[0].mxu0
    %480 = vmatprep.mubr.bf16.mxu0 0
    %481 = vmatmul.mubr.bf16.gmra.mrb[0].mxu0 %v294
    %v482 = vpop.f32.mrb[0].mxu0
    %v483 = vadd.f32 0.0, %v482
    %v484 = vpop.f32.mrb[0].mxu0
    %v485 = vpop.f32.mrb[0].mxu0
    %v486 = vadd.f32 0.0, %v485
    %v487 = vpop.f32.mrb[0].mxu0
    %488 = vmatprep.mubr.bf16.mxu0 0
    %489 = vmatmul.mubr.bf16.gmra.mrb[0].mxu0 %v297
    %v490 = vpop.f32.mrb[0].mxu0
    %v491 = vadd.f32 0.0, %v490
    %v492 = vpop.f32.mrb[0].mxu0
    %v493 = vpop.f32.mrb[0].mxu0
    %v494 = vadd.f32 0.0, %v493
    %v495 = vpop.f32.mrb[0].mxu0
    %496 = vmatprep.mubr.bf16.mxu0 0
    %497 = vmatmul.mubr.bf16.gmra.mrb[0].mxu0 %v300
    %v498 = vpop.f32.mrb[0].mxu0
    %v499 = vadd.f32 0.0, %v498
    %v500 = vpop.f32.mrb[0].mxu0
    %v501 = vpop.f32.mrb[0].mxu0
    %v502 = vadd.f32 0.0, %v501
    %v503 = vpop.f32.mrb[0].mxu0
    %504 = vmatprep.mubr.bf16.mxu0 0
    %505 = vmatmul.mubr.bf16.gmra.mrb[0].mxu0 %v303
    %v506 = vpop.f32.mrb[0].mxu0
    %v507 = vadd.f32 0.0, %v506
    %v508 = vpop.f32.mrb[0].mxu0
    %v509 = vpop.f32.mrb[0].mxu0
    %v510 = vadd.f32 0.0, %v509
    %v511 = vpop.f32.mrb[0].mxu0
    %512 = vmatprep.mubr.bf16.mxu0 0
    %513 = vmatmul.mubr.bf16.gmra.mrb[0].mxu0 %v306
    %v514 = vpop.f32.mrb[0].mxu0
    %v515 = vadd.f32 0.0, %v514
    %v516 = vpop.f32.mrb[0].mxu0
    %v517 = vpop.f32.mrb[0].mxu0
    %v518 = vadd.f32 0.0, %v517
    %v519 = vpop.f32.mrb[0].mxu0
    %520 = vmatprep.mubr.bf16.mxu0 0
    %521 = vmatmul.mubr.bf16.gmra.mrb[0].mxu0 %v309
    %v522 = vpop.f32.mrb[0].mxu0
    %v523 = vadd.f32 0.0, %v522
    %v524 = vpop.f32.mrb[0].mxu0
    %v525 = vpop.f32.mrb[0].mxu0
    %v526 = vadd.f32 0.0, %v525
    %v527 = vpop.f32.mrb[0].mxu0
    %528 = vmatprep.mubr.bf16.mxu0 0
    %529 = vmatmul.mubr.bf16.gmra.mrb[0].mxu0 %v312
    %v530 = vpop.f32.mrb[0].mxu0
    %v531 = vadd.f32 0.0, %v530
    %v532 = vpop.f32.mrb[0].mxu0
    %v533 = vpop.f32.mrb[0].mxu0
    %v534 = vadd.f32 0.0, %v533
    %v535 = vpop.f32.mrb[0].mxu0
    %536 = vmatprep.mubr.bf16.mxu0 0
    %537 = vmatmul.mubr.bf16.gmra.mrb[0].mxu0 %v315
    %v538 = vpop.f32.mrb[0].mxu0
    %v539 = vadd.f32 0.0, %v538
    %v540 = vpop.f32.mrb[0].mxu0
    %v541 = vpop.f32.mrb[0].mxu0
    %v542 = vadd.f32 0.0, %v541
    %v543 = vpop.f32.mrb[0].mxu0
    %544 = vmatprep.mubr.bf16.mxu0 0
    %545 = vmatmul.mubr.bf16.gmra.mrb[0].mxu0 %v318
    %v546 = vpop.f32.mrb[0].mxu0
    %v547 = vadd.f32 0.0, %v546
    %v548 = vpop.f32.mrb[0].mxu0
    %v549 = vpop.f32.mrb[0].mxu0
    %v550 = vadd.f32 0.0, %v549
    %v551 = vpop.f32.mrb[0].mxu0
    %552 = vmatprep.mubr.bf16.mxu0 0
    %553 = vmatmul.mubr.bf16.gmra.mrb[0].mxu0 %v321
    %v554 = vpop.f32.mrb[0].mxu0
    %v555 = vadd.f32 0.0, %v554
    %v556 = vpop.f32.mrb[0].mxu0
    %v557 = vpop.f32.mrb[0].mxu0
    %v558 = vadd.f32 0.0, %v557
    %v559 = vpop.f32.mrb[0].mxu0
    %560 = vmatprep.mubr.bf16.mxu0 0
    %561 = vmatmul.mubr.bf16.gmra.mrb[0].mxu0 %v324
    %v562 = vpop.f32.mrb[0].mxu0
    %v563 = vadd.f32 0.0, %v562
    %v564 = vpop.f32.mrb[0].mxu0
    %v565 = vpop.f32.mrb[0].mxu0
    %v566 = vadd.f32 0.0, %v565
    %v567 = vpop.f32.mrb[0].mxu0
    %568 = vmatprep.mubr.bf16.mxu0 0
    %569 = vmatmul.mubr.bf16.gmra.mrb[0].mxu0 %v327
    %v570 = vpop.f32.mrb[0].mxu0
    %v571 = vadd.f32 0.0, %v570
    %v572 = vpop.f32.mrb[0].mxu0
    %v573 = vpop.f32.mrb[0].mxu0
    %v574 = vadd.f32 0.0, %v573
    %v575 = vpop.f32.mrb[0].mxu0
    %576 = vmatprep.mubr.bf16.mxu0 0
    %577 = vmatmul.mubr.bf16.gmra.mrb[0].mxu0 %v330
    %v578 = vpop.f32.mrb[0].mxu0
    %v579 = vadd.f32 0.0, %v578
    %v580 = vpop.f32.mrb[0].mxu0
    %v581 = vpop.f32.mrb[0].mxu0
    %v582 = vadd.f32 0.0, %v581
    %v583 = vpop.f32.mrb[0].mxu0
    %584 = vmatprep.mubr.bf16.mxu0 0
    %585 = vmatmul.mubr.bf16.gmra.mrb[0].mxu0 %v333
    %v586 = vpop.f32.mrb[0].mxu0
    %v587 = vadd.f32 0.0, %v586
    %v588 = vpop.f32.mrb[0].mxu0
    %v589 = vpop.f32.mrb[0].mxu0
    %v590 = vadd.f32 0.0, %v589
    %v591 = vpop.f32.mrb[0].mxu0
    %592 = vmatprep.mubr.bf16.mxu0 0
    %593 = vmatmul.mubr.bf16.gmra.mrb[0].mxu0 %v336
    %v594 = vpop.f32.mrb[0].mxu0
    %v595 = vadd.f32 0.0, %v594
    %v596 = vpop.f32.mrb[0].mxu0
    %v597 = vpop.f32.mrb[0].mxu0
    %v598 = vadd.f32 0.0, %v597
    %v599 = vpop.f32.mrb[0].mxu0
    %600 = vmatprep.mubr.bf16.mxu0 0
    %601 = vmatmul.mubr.bf16.gmra.mrb[0].mxu0 %v339
    %v602 = vpop.f32.mrb[0].mxu0
    %v603 = vadd.f32 0.0, %v602
    %v604 = vpop.f32.mrb[0].mxu0
    %v605 = vpop.f32.mrb[0].mxu0
    %v606 = vadd.f32 0.0, %v605
    %v607 = vpop.f32.mrb[0].mxu0
    %608 = vmatprep.mubr.bf16.mxu0 0
    %609 = vmatmul.mubr.bf16.gmra.mrb[0].mxu0 %v342
    %v610 = vpop.f32.mrb[0].mxu0
    %v611 = vadd.f32 0.0, %v610
    %v612 = vpop.f32.mrb[0].mxu0
    %v613 = vpop.f32.mrb[0].mxu0
    %v614 = vadd.f32 0.0, %v613
    %v615 = vpop.f32.mrb[0].mxu0
    %616 = vmatprep.mubr.bf16.mxu0 0
    %617 = vmatmul.mubr.bf16.gmra.mrb[0].mxu0 %v345
    %v618 = vpop.f32.mrb[0].mxu0
    %v619 = vadd.f32 0.0, %v618
    %v620 = vpop.f32.mrb[0].mxu0
    %v621 = vpop.f32.mrb[0].mxu0
    %v622 = vadd.f32 0.0, %v621
    %v623 = vpop.f32.mrb[0].mxu0
    %624 = vmatprep.mubr.bf16.mxu0 0
    %625 = vmatmul.mubr.bf16.gmra.mrb[0].mxu0 %v348
    %v626 = vpop.f32.mrb[0].mxu0
    %v627 = vadd.f32 0.0, %v626
    %v628 = vpop.f32.mrb[0].mxu0
    %v629 = vpop.f32.mrb[0].mxu0
    %v630 = vadd.f32 0.0, %v629
    %v631 = vpop.f32.mrb[0].mxu0
    %632 = vmatprep.mubr.bf16.mxu0 0
    %633 = vmatmul.mubr.bf16.gmra.mrb[0].mxu0 %v351
    %v634 = vpop.f32.mrb[0].mxu0
    %v635 = vadd.f32 0.0, %v634
    %v636 = vpop.f32.mrb[0].mxu0
    %v637 = vpop.f32.mrb[0].mxu0
    %v638 = vadd.f32 0.0, %v637
    %v639 = vpop.f32.mrb[0].mxu0
    %640 = vmatprep.mubr.bf16.mxu0 0
    %641 = vmatmul.mubr.bf16.gmra.mrb[0].mxu0 %v354
    %v642 = vpop.f32.mrb[0].mxu0
    %v643 = vadd.f32 0.0, %v642
    %v644 = vpop.f32.mrb[0].mxu0
    %v645 = vpop.f32.mrb[0].mxu0
    %v646 = vadd.f32 0.0, %v645
    %v647 = vpop.f32.mrb[0].mxu0
    %648 = vdwg.mxu0
    %vm649 = vcmask 31744
    %650 = vst.msk [vmem:[%s2] sm:$0xff] %vm649, %v395
    %651 = vst.msk [vmem:[%s2 + $0x8] sm:$0xff] %vm649, %v398
    %652 = vst.msk [vmem:[%s2 + $0x10] sm:$0xff] %vm649, %v403
    %653 = vst.msk [vmem:[%s2 + $0x18] sm:$0xff] %vm649, %v406
    %654 = vst.msk [vmem:[%s2 + $0x20] sm:$0xff] %vm649, %v411
    %655 = vst.msk [vmem:[%s2 + $0x28] sm:$0xff] %vm649, %v414
    %656 = vst.msk [vmem:[%s2 + $0x30] sm:$0xff] %vm649, %v419
    %657 = vst.msk [vmem:[%s2 + $0x38] sm:$0xff] %vm649, %v422
    %658 = vst.msk [vmem:[%s2 + $0x40] sm:$0xff] %vm649, %v427
    %659 = vst.msk [vmem:[%s2 + $0x48] sm:$0xff] %vm649, %v430
    %660 = vst.msk [vmem:[%s2 + $0x50] sm:$0xff] %vm649, %v435
    %661 = vst.msk [vmem:[%s2 + $0x58] sm:$0xff] %vm649, %v438
    %662 = vst.msk [vmem:[%s2 + $0x60] sm:$0xff] %vm649, %v443
    %663 = vst.msk [vmem:[%s2 + $0x68] sm:$0xff] %vm649, %v446
    %664 = vst.msk [vmem:[%s2 + $0x70] sm:$0xff] %vm649, %v451
    %665 = vst.msk [vmem:[%s2 + $0x78] sm:$0xff] %vm649, %v454
    %666 = vst.msk [vmem:[%s2 + $0x80] sm:$0xff] %vm649, %v459
    %667 = vst.msk [vmem:[%s2 + $0x88] sm:$0xff] %vm649, %v462
    %668 = vst.msk [vmem:[%s2 + $0x90] sm:$0xff] %vm649, %v467
    %669 = vst.msk [vmem:[%s2 + $0x98] sm:$0xff] %vm649, %v470
    %670 = vst.msk [vmem:[%s2 + $0xa0] sm:$0xff] %vm649, %v475
    %671 = vst.msk [vmem:[%s2 + $0xa8] sm:$0xff] %vm649, %v478
    %672 = vst.msk [vmem:[%s2 + $0xb0] sm:$0xff] %vm649, %v483
    %673 = vst.msk [vmem:[%s2 + $0xb8] sm:$0xff] %vm649, %v486
    %674 = vst.msk [vmem:[%s2 + $0xc0] sm:$0xff] %vm649, %v491
    %675 = vst.msk [vmem:[%s2 + $0xc8] sm:$0xff] %vm649, %v494
    %676 = vst.msk [vmem:[%s2 + $0xd0] sm:$0xff] %vm649, %v499
    %677 = vst.msk [vmem:[%s2 + $0xd8] sm:$0xff] %vm649, %v502
    %678 = vst.msk [vmem:[%s2 + $0xe0] sm:$0xff] %vm649, %v507
    %679 = vst.msk [vmem:[%s2 + $0xe8] sm:$0xff] %vm649, %v510
    %680 = vst.msk [vmem:[%s2 + $0xf0] sm:$0xff] %vm649, %v515
    %681 = vst.msk [vmem:[%s2 + $0xf8] sm:$0xff] %vm649, %v518
    %682 = vst.msk [vmem:[%s2 + $0x100] sm:$0xff] %vm649, %v523
    %683 = vst.msk [vmem:[%s2 + $0x108] sm:$0xff] %vm649, %v526
    %684 = vst.msk [vmem:[%s2 + $0x110] sm:$0xff] %vm649, %v531
    %685 = vst.msk [vmem:[%s2 + $0x118] sm:$0xff] %vm649, %v534
    %686 = vst.msk [vmem:[%s2 + $0x120] sm:$0xff] %vm649, %v539
    %687 = vst.msk [vmem:[%s2 + $0x128] sm:$0xff] %vm649, %v542
    %688 = vst.msk [vmem:[%s2 + $0x130] sm:$0xff] %vm649, %v547
    %689 = vst.msk [vmem:[%s2 + $0x138] sm:$0xff] %vm649, %v550
    %690 = vst.msk [vmem:[%s2 + $0x140] sm:$0xff] %vm649, %v555
    %691 = vst.msk [vmem:[%s2 + $0x148] sm:$0xff] %vm649, %v558
    %692 = vst.msk [vmem:[%s2 + $0x150] sm:$0xff] %vm649, %v563
    %693 = vst.msk [vmem:[%s2 + $0x158] sm:$0xff] %vm649, %v566
    %694 = vst.msk [vmem:[%s2 + $0x160] sm:$0xff] %vm649, %v571
    %695 = vst.msk [vmem:[%s2 + $0x168] sm:$0xff] %vm649, %v574
    %696 = vst.msk [vmem:[%s2 + $0x170] sm:$0xff] %vm649, %v579
    %697 = vst.msk [vmem:[%s2 + $0x178] sm:$0xff] %vm649, %v582
    %698 = vst.msk [vmem:[%s2 + $0x180] sm:$0xff] %vm649, %v587
    %699 = vst.msk [vmem:[%s2 + $0x188] sm:$0xff] %vm649, %v590
    %700 = vst.msk [vmem:[%s2 + $0x190] sm:$0xff] %vm649, %v595
    %701 = vst.msk [vmem:[%s2 + $0x198] sm:$0xff] %vm649, %v598
    %702 = vst.msk [vmem:[%s2 + $0x1a0] sm:$0xff] %vm649, %v603
    %703 = vst.msk [vmem:[%s2 + $0x1a8] sm:$0xff] %vm649, %v606
    %704 = vst.msk [vmem:[%s2 + $0x1b0] sm:$0xff] %vm649, %v611
    %705 = vst.msk [vmem:[%s2 + $0x1b8] sm:$0xff] %vm649, %v614
    %706 = vst.msk [vmem:[%s2 + $0x1c0] sm:$0xff] %vm649, %v619
    %707 = vst.msk [vmem:[%s2 + $0x1c8] sm:$0xff] %vm649, %v622
    %708 = vst.msk [vmem:[%s2 + $0x1d0] sm:$0xff] %vm649, %v627
    %709 = vst.msk [vmem:[%s2 + $0x1d8] sm:$0xff] %vm649, %v630
    %710 = vst.msk [vmem:[%s2 + $0x1e0] sm:$0xff] %vm649, %v635
    %711 = vst.msk [vmem:[%s2 + $0x1e8] sm:$0xff] %vm649, %v638
    %712 = vst.msk [vmem:[%s2 + $0x1f0] sm:$0xff] %vm649, %v643
    %713 = vst.msk [vmem:[%s2 + $0x1f8] sm:$0xff] %vm649, %v646
    %p714 = scmp.eq.s32.totalorder 0, 0
    // Predicated region
    $region10: #{tpu_custom_call.1} parent=1 // pred_check
      %p715 = pneg %p714
    $region11: #{tpu_custom_call.1} parent=1 // pred_check_branch
      %717 = sbr.rel (%p715) target = $region13
    $region12: #{tpu_custom_call.1} parent=1 // pred_region
      %vm718 = vcmask 25600
      %719 = vst.msk [vmem:[#allocation2] sm:$0x3] %vm718, 0.0
    $region13: #{tpu_custom_call.1} parent=1 // pred_fallthru
      _
    %v720 = vld [vmem:[#allocation2] sm:$0x1]
    %v721 = vsel %vm649, %v395, 0.0
    %v722 = vsel %vm649, %v398, 0.0
    %v723 = vadd.f32 %v721, %v722
    %v724 = vsel %vm649, %v403, 0.0
    %v725 = vadd.f32 %v723, %v724
    %v726 = vsel %vm649, %v406, 0.0
    %v727 = vadd.f32 %v725, %v726
    %v728 = vsel %vm649, %v411, 0.0
    %v729 = vadd.f32 %v727, %v728
    %v730 = vsel %vm649, %v414, 0.0
    %v731 = vadd.f32 %v729, %v730
    %v732 = vsel %vm649, %v419, 0.0
    %v733 = vadd.f32 %v731, %v732
    %v734 = vsel %vm649, %v422, 0.0
    %v735 = vadd.f32 %v733, %v734
    %v736 = vsel %vm649, %v427, 0.0
    %v737 = vadd.f32 %v735, %v736
    %v738 = vsel %vm649, %v430, 0.0
    %v739 = vadd.f32 %v737, %v738
    %v740 = vsel %vm649, %v435, 0.0
    %v741 = vadd.f32 %v739, %v740
    %v742 = vsel %vm649, %v438, 0.0
    %v743 = vadd.f32 %v741, %v742
    %v744 = vsel %vm649, %v443, 0.0
    %v745 = vadd.f32 %v743, %v744
    %v746 = vsel %vm649, %v446, 0.0
    %v747 = vadd.f32 %v745, %v746
    %v748 = vsel %vm649, %v451, 0.0
    %v749 = vadd.f32 %v747, %v748
    %v750 = vsel %vm649, %v454, 0.0
    %v751 = vadd.f32 %v749, %v750
    %v752 = vsel %vm649, %v459, 0.0
    %v753 = vadd.f32 %v751, %v752
    %v754 = vsel %vm649, %v462, 0.0
    %v755 = vadd.f32 %v753, %v754
    %v756 = vsel %vm649, %v467, 0.0
    %v757 = vadd.f32 %v755, %v756
    %v758 = vsel %vm649, %v470, 0.0
    %v759 = vadd.f32 %v757, %v758
    %v760 = vsel %vm649, %v475, 0.0
    %v761 = vadd.f32 %v759, %v760
    %v762 = vsel %vm649, %v478, 0.0
    %v763 = vadd.f32 %v761, %v762
    %v764 = vsel %vm649, %v483, 0.0
    %v765 = vadd.f32 %v763, %v764
    %v766 = vsel %vm649, %v486, 0.0
    %v767 = vadd.f32 %v765, %v766
    %v768 = vsel %vm649, %v491, 0.0
    %v769 = vadd.f32 %v767, %v768
    %v770 = vsel %vm649, %v494, 0.0
    %v771 = vadd.f32 %v769, %v770
    %v772 = vsel %vm649, %v499, 0.0
    %v773 = vadd.f32 %v771, %v772
    %v774 = vsel %vm649, %v502, 0.0
    %v775 = vadd.f32 %v773, %v774
    %v776 = vsel %vm649, %v507, 0.0
    %v777 = vadd.f32 %v775, %v776
    %v778 = vsel %vm649, %v510, 0.0
    %v779 = vadd.f32 %v777, %v778
    %v780 = vsel %vm649, %v515, 0.0
    %v781 = vadd.f32 %v779, %v780
    %v782 = vsel %vm649, %v518, 0.0
    %v783 = vadd.f32 %v781, %v782
    %v784 = vsel %vm649, %v523, 0.0
    %v785 = vadd.f32 %v783, %v784
    %v786 = vsel %vm649, %v526, 0.0
    %v787 = vadd.f32 %v785, %v786
    %v788 = vsel %vm649, %v531, 0.0
    %v789 = vadd.f32 %v787, %v788
    %v790 = vsel %vm649, %v534, 0.0
    %v791 = vadd.f32 %v789, %v790
    %v792 = vsel %vm649, %v539, 0.0
    %v793 = vadd.f32 %v791, %v792
    %v794 = vsel %vm649, %v542, 0.0
    %v795 = vadd.f32 %v793, %v794
    %v796 = vsel %vm649, %v547, 0.0
    %v797 = vadd.f32 %v795, %v796
    %v798 = vsel %vm649, %v550, 0.0
    %v799 = vadd.f32 %v797, %v798
    %v800 = vsel %vm649, %v555, 0.0
    %v801 = vadd.f32 %v799, %v800
    %v802 = vsel %vm649, %v558, 0.0
    %v803 = vadd.f32 %v801, %v802
    %v804 = vsel %vm649, %v563, 0.0
    %v805 = vadd.f32 %v803, %v804
    %v806 = vsel %vm649, %v566, 0.0
    %v807 = vadd.f32 %v805, %v806
    %v808 = vsel %vm649, %v571, 0.0
    %v809 = vadd.f32 %v807, %v808
    %v810 = vsel %vm649, %v574, 0.0
    %v811 = vadd.f32 %v809, %v810
    %v812 = vsel %vm649, %v579, 0.0
    %v813 = vadd.f32 %v811, %v812
    %v814 = vsel %vm649, %v582, 0.0
    %v815 = vadd.f32 %v813, %v814
    %v816 = vsel %vm649, %v587, 0.0
    %v817 = vadd.f32 %v815, %v816
    %v818 = vsel %vm649, %v590, 0.0
    %v819 = vadd.f32 %v817, %v818
    %v820 = vsel %vm649, %v595, 0.0
    %v821 = vadd.f32 %v819, %v820
    %v822 = vsel %vm649, %v598, 0.0
    %v823 = vadd.f32 %v821, %v822
    %v824 = vsel %vm649, %v603, 0.0
    %v825 = vadd.f32 %v823, %v824
    %v826 = vsel %vm649, %v606, 0.0
    %v827 = vadd.f32 %v825, %v826
    %v828 = vsel %vm649, %v611, 0.0
    %v829 = vadd.f32 %v827, %v828
    %v830 = vsel %vm649, %v614, 0.0
    %v831 = vadd.f32 %v829, %v830
    %v832 = vsel %vm649, %v619, 0.0
    %v833 = vadd.f32 %v831, %v832
    %v834 = vsel %vm649, %v622, 0.0
    %v835 = vadd.f32 %v833, %v834
    %v836 = vsel %vm649, %v627, 0.0
    %v837 = vadd.f32 %v835, %v836
    %v838 = vsel %vm649, %v630, 0.0
    %v839 = vadd.f32 %v837, %v838
    %v840 = vsel %vm649, %v635, 0.0
    %v841 = vadd.f32 %v839, %v840
    %v842 = vsel %vm649, %v638, 0.0
    %v843 = vadd.f32 %v841, %v842
    %v844 = vsel %vm649, %v643, 0.0
    %v845 = vadd.f32 %v843, %v844
    %v846 = vsel %vm649, %v646, 0.0
    %v847 = vadd.f32 %v845, %v846
    %v848 = vrot.slane %v847, 4
    %v849 = vadd.f32 %v847, %v848
    %v850 = vrot.slane %v849, 2
    %v851 = vadd.f32 %v849, %v850
    %v852 = vrot.slane %v851, 1
    %v853 = vadd.f32 %v851, %v852
    %v854 = vadd.f32 %v720, %v853
    %vm855 = vcmask 24576
    %856 = vst.msk [vmem:[#allocation2] sm:$0x1] %vm855, %v854
    %v857 = vld [vmem:[#allocation2 + $0x1] sm:$0x1]
    %v858 = vmul.f32 %v395, %v395
    %v859 = vmul.f32 %v398, %v398
    %v860 = vmul.f32 %v403, %v403
    %v861 = vmul.f32 %v406, %v406
    %v862 = vmul.f32 %v411, %v411
    %v863 = vmul.f32 %v414, %v414
    %v864 = vmul.f32 %v419, %v419
    %v865 = vmul.f32 %v422, %v422
    %v866 = vmul.f32 %v427, %v427
    %v867 = vmul.f32 %v430, %v430
    %v868 = vmul.f32 %v435, %v435
    %v869 = vmul.f32 %v438, %v438
    %v870 = vmul.f32 %v443, %v443
    %v871 = vmul.f32 %v446, %v446
    %v872 = vmul.f32 %v451, %v451
    %v873 = vmul.f32 %v454, %v454
    %v874 = vmul.f32 %v459, %v459
    %v875 = vmul.f32 %v462, %v462
    %v876 = vmul.f32 %v467, %v467
    %v877 = vmul.f32 %v470, %v470
    %v878 = vmul.f32 %v475, %v475
    %v879 = vmul.f32 %v478, %v478
    %v880 = vmul.f32 %v483, %v483
    %v881 = vmul.f32 %v486, %v486
    %v882 = vmul.f32 %v491, %v491
    %v883 = vmul.f32 %v494, %v494
    %v884 = vmul.f32 %v499, %v499
    %v885 = vmul.f32 %v502, %v502
    %v886 = vmul.f32 %v507, %v507
    %v887 = vmul.f32 %v510, %v510
    %v888 = vmul.f32 %v515, %v515
    %v889 = vmul.f32 %v518, %v518
    %v890 = vmul.f32 %v523, %v523
    %v891 = vmul.f32 %v526, %v526
    %v892 = vmul.f32 %v531, %v531
    %v893 = vmul.f32 %v534, %v534
    %v894 = vmul.f32 %v539, %v539
    %v895 = vmul.f32 %v542, %v542
    %v896 = vmul.f32 %v547, %v547
    %v897 = vmul.f32 %v550, %v550
    %v898 = vmul.f32 %v555, %v555
    %v899 = vmul.f32 %v558, %v558
    %v900 = vmul.f32 %v563, %v563
    %v901 = vmul.f32 %v566, %v566
    %v902 = vmul.f32 %v571, %v571
    %v903 = vmul.f32 %v574, %v574
    %v904 = vmul.f32 %v579, %v579
    %v905 = vmul.f32 %v582, %v582
    %v906 = vmul.f32 %v587, %v587
    %v907 = vmul.f32 %v590, %v590
    %v908 = vmul.f32 %v595, %v595
    %v909 = vmul.f32 %v598, %v598
    %v910 = vmul.f32 %v603, %v603
    %v911 = vmul.f32 %v606, %v606
    %v912 = vmul.f32 %v611, %v611
    %v913 = vmul.f32 %v614, %v614
    %v914 = vmul.f32 %v619, %v619
    %v915 = vmul.f32 %v622, %v622
    %v916 = vmul.f32 %v627, %v627
    %v917 = vmul.f32 %v630, %v630
    %v918 = vmul.f32 %v635, %v635
    %v919 = vmul.f32 %v638, %v638
    %v920 = vmul.f32 %v643, %v643
    %v921 = vmul.f32 %v646, %v646
    %v922 = vsel %vm649, %v858, 0.0
    %v923 = vsel %vm649, %v859, 0.0
    %v924 = vadd.f32 %v922, %v923
    %v925 = vsel %vm649, %v860, 0.0
    %v926 = vadd.f32 %v924, %v925
    %v927 = vsel %vm649, %v861, 0.0
    %v928 = vadd.f32 %v926, %v927
    %v929 = vsel %vm649, %v862, 0.0
    %v930 = vadd.f32 %v928, %v929
    %v931 = vsel %vm649, %v863, 0.0
    %v932 = vadd.f32 %v930, %v931
    %v933 = vsel %vm649, %v864, 0.0
    %v934 = vadd.f32 %v932, %v933
    %v935 = vsel %vm649, %v865, 0.0
    %v936 = vadd.f32 %v934, %v935
    %v937 = vsel %vm649, %v866, 0.0
    %v938 = vadd.f32 %v936, %v937
    %v939 = vsel %vm649, %v867, 0.0
    %v940 = vadd.f32 %v938, %v939
    %v941 = vsel %vm649, %v868, 0.0
    %v942 = vadd.f32 %v940, %v941
    %v943 = vsel %vm649, %v869, 0.0
    %v944 = vadd.f32 %v942, %v943
    %v945 = vsel %vm649, %v870, 0.0
    %v946 = vadd.f32 %v944, %v945
    %v947 = vsel %vm649, %v871, 0.0
    %v948 = vadd.f32 %v946, %v947
    %v949 = vsel %vm649, %v872, 0.0
    %v950 = vadd.f32 %v948, %v949
    %v951 = vsel %vm649, %v873, 0.0
    %v952 = vadd.f32 %v950, %v951
    %v953 = vsel %vm649, %v874, 0.0
    %v954 = vadd.f32 %v952, %v953
    %v955 = vsel %vm649, %v875, 0.0
    %v956 = vadd.f32 %v954, %v955
    %v957 = vsel %vm649, %v876, 0.0
    %v958 = vadd.f32 %v956, %v957
    %v959 = vsel %vm649, %v877, 0.0
    %v960 = vadd.f32 %v958, %v959
    %v961 = vsel %vm649, %v878, 0.0
    %v962 = vadd.f32 %v960, %v961
    %v963 = vsel %vm649, %v879, 0.0
    %v964 = vadd.f32 %v962, %v963
    %v965 = vsel %vm649, %v880, 0.0
    %v966 = vadd.f32 %v964, %v965
    %v967 = vsel %vm649, %v881, 0.0
    %v968 = vadd.f32 %v966, %v967
    %v969 = vsel %vm649, %v882, 0.0
    %v970 = vadd.f32 %v968, %v969
    %v971 = vsel %vm649, %v883, 0.0
    %v972 = vadd.f32 %v970, %v971
    %v973 = vsel %vm649, %v884, 0.0
    %v974 = vadd.f32 %v972, %v973
    %v975 = vsel %vm649, %v885, 0.0
    %v976 = vadd.f32 %v974, %v975
    %v977 = vsel %vm649, %v886, 0.0
    %v978 = vadd.f32 %v976, %v977
    %v979 = vsel %vm649, %v887, 0.0
    %v980 = vadd.f32 %v978, %v979
    %v981 = vsel %vm649, %v888, 0.0
    %v982 = vadd.f32 %v980, %v981
    %v983 = vsel %vm649, %v889, 0.0
    %v984 = vadd.f32 %v982, %v983
    %v985 = vsel %vm649, %v890, 0.0
    %v986 = vadd.f32 %v984, %v985
    %v987 = vsel %vm649, %v891, 0.0
    %v988 = vadd.f32 %v986, %v987
    %v989 = vsel %vm649, %v892, 0.0
    %v990 = vadd.f32 %v988, %v989
    %v991 = vsel %vm649, %v893, 0.0
    %v992 = vadd.f32 %v990, %v991
    %v993 = vsel %vm649, %v894, 0.0
    %v994 = vadd.f32 %v992, %v993
    %v995 = vsel %vm649, %v895, 0.0
    %v996 = vadd.f32 %v994, %v995
    %v997 = vsel %vm649, %v896, 0.0
    %v998 = vadd.f32 %v996, %v997
    %v999 = vsel %vm649, %v897, 0.0
    %v1000 = vadd.f32 %v998, %v999
    %v1001 = vsel %vm649, %v898, 0.0
    %v1002 = vadd.f32 %v1000, %v1001
    %v1003 = vsel %vm649, %v899, 0.0
    %v1004 = vadd.f32 %v1002, %v1003
    %v1005 = vsel %vm649, %v900, 0.0
    %v1006 = vadd.f32 %v1004, %v1005
    %v1007 = vsel %vm649, %v901, 0.0
    %v1008 = vadd.f32 %v1006, %v1007
    %v1009 = vsel %vm649, %v902, 0.0
    %v1010 = vadd.f32 %v1008, %v1009
    %v1011 = vsel %vm649, %v903, 0.0
    %v1012 = vadd.f32 %v1010, %v1011
    %v1013 = vsel %vm649, %v904, 0.0
    %v1014 = vadd.f32 %v1012, %v1013
    %v1015 = vsel %vm649, %v905, 0.0
    %v1016 = vadd.f32 %v1014, %v1015
    %v1017 = vsel %vm649, %v906, 0.0
    %v1018 = vadd.f32 %v1016, %v1017
    %v1019 = vsel %vm649, %v907, 0.0
    %v1020 = vadd.f32 %v1018, %v1019
    %v1021 = vsel %vm649, %v908, 0.0
    %v1022 = vadd.f32 %v1020, %v1021
    %v1023 = vsel %vm649, %v909, 0.0
    %v1024 = vadd.f32 %v1022, %v1023
    %v1025 = vsel %vm649, %v910, 0.0
    %v1026 = vadd.f32 %v1024, %v1025
    %v1027 = vsel %vm649, %v911, 0.0
    %v1028 = vadd.f32 %v1026, %v1027
    %v1029 = vsel %vm649, %v912, 0.0
    %v1030 = vadd.f32 %v1028, %v1029
    %v1031 = vsel %vm649, %v913, 0.0
    %v1032 = vadd.f32 %v1030, %v1031
    %v1033 = vsel %vm649, %v914, 0.0
    %v1034 = vadd.f32 %v1032, %v1033
    %v1035 = vsel %vm649, %v915, 0.0
    %v1036 = vadd.f32 %v1034, %v1035
    %v1037 = vsel %vm649, %v916, 0.0
    %v1038 = vadd.f32 %v1036, %v1037
    %v1039 = vsel %vm649, %v917, 0.0
    %v1040 = vadd.f32 %v1038, %v1039
    %v1041 = vsel %vm649, %v918, 0.0
    %v1042 = vadd.f32 %v1040, %v1041
    %v1043 = vsel %vm649, %v919, 0.0
    %v1044 = vadd.f32 %v1042, %v1043
    %v1045 = vsel %vm649, %v920, 0.0
    %v1046 = vadd.f32 %v1044, %v1045
    %v1047 = vsel %vm649, %v921, 0.0
    %v1048 = vadd.f32 %v1046, %v1047
    %v1049 = vrot.slane %v1048, 4
    %v1050 = vadd.f32 %v1048, %v1049
    %v1051 = vrot.slane %v1050, 2
    %v1052 = vadd.f32 %v1050, %v1051
    %v1053 = vrot.slane %v1052, 1
    %v1054 = vadd.f32 %v1052, %v1053
    %v1055 = vadd.f32 %v857, %v1054
    %1056 = vst.msk [vmem:[#allocation2 + $0x1] sm:$0x1] %vm855, %v1055
    // Predicated region
    $region14: #{tpu_custom_call.1} parent=1 // pred_check
      _
    $region15: #{tpu_custom_call.1} parent=1 // pred_check_branch
      %1058 = sbr.rel (0) target = $region17
    $region16: #{tpu_custom_call.1} parent=1 // pred_region
      _
    $region17: #{tpu_custom_call.1} parent=1 // pred_fallthru
      _
    // Predicated region
    $region18: #{tpu_custom_call.1} parent=1 // pred_check
      _
    $region19: #{tpu_custom_call.1} parent=1 // pred_check_branch
      %1060 = sbr.rel (0) target = $region21
    $region20: #{tpu_custom_call.1} parent=1 // pred_region
      %s1062 = ssub.s32 32, 32
      %1063 = vsyncadd [#allocation3], %s1062
      %s1065 = sshll.u32 [#allocation2], 4
      %s1066 = int_to_ptr.vmem [resolvable:$true] %s1065
      %1068 = dma.vmem_to_hbm [thread:$0]  %s1066, 32, %s3, [#allocation3]
    $region21: #{tpu_custom_call.1} parent=1 // pred_fallthru
      _
    // Predicated region
    $region22: #{tpu_custom_call.1} parent=1 // pred_check
      _
    $region23: #{tpu_custom_call.1} parent=1 // pred_check_branch
      %1070 = sbr.rel (0) target = $region25
    $region24: #{tpu_custom_call.1} parent=1 // pred_region
      _
    $region25: #{tpu_custom_call.1} parent=1 // pred_fallthru
      _
    // Predicated region
    $region26: #{tpu_custom_call.1} parent=1 // pred_check
      _
    $region27: #{tpu_custom_call.1} parent=1 // pred_check_branch
      %1072 = sbr.rel (0) target = $region29
    $region28: #{tpu_custom_call.1} parent=1 // pred_region
      %1073 = dma.done [#allocation3], 32
    $region29: #{tpu_custom_call.1} parent=1 // pred_fallthru
      _
    %1074 = vsyncpa [#allocation3], 1

</llo_original>
